<compile_context>
chip_gen: v7x
topology: tpu7x:2x2x1
jax: 0.10.0
libtpu: 0.0.40
codegen_flags: <defaults>
</compile_context>

<pallas_src>
import jax
import jax.numpy as jnp
from jax.experimental import pallas as pl
from jax.experimental.pallas import tpu as pltpu

NUM_CLASSES = 3
C_PAD = 128            # lane-dense padded head width
DEFAULT_TILE_B = 16    # batch rows per block (multiple of 8)


def _round_up(x, m):
    return ((x + m - 1) // m) * m


def _vmem_budget_bytes():
    """Generation-aware scoped-VMEM budget (leave headroom on v7x's 64 MiB)."""
    try:
        cap = pltpu.get_tpu_info().vmem_capacity_bytes
    except Exception:
        cap = 64 * 1024 * 1024          # conservative fallback (v7x per-core VMEM)
    return min(int(cap * 0.75), 96 * 1024 * 1024)


def _choose_tiles(B, S, H, elt_bytes, budget, tile_b=DEFAULT_TILE_B):
    """Pick (TB, B_pad, TS, S_pad) so double-buffered blocks fit the budget."""
    # Batch tile: take the full (small) batch when possible -> no batch pad;
    # otherwise a multiple of 8 (keeps >=2 batch blocks for B >= 2*tile_b).
    if B <= tile_b:
        TB, B_pad = B, B
    else:
        TB = tile_b
        B_pad = _round_up(B, TB)

    # Non-streamed VMEM: weights/bias/denom/out (double-buffered), accumulator
    # scratch (sublane dim 1 pads to 8), plus compiler-internal headroom.
    fixed = 2 * (H * C_PAD * 4 + C_PAD * 4 + TB * 4)
    fixed += 2 * TB * C_PAD * 4
    fixed += TB * 8 * H * 4
    fixed += 2 * 1024 * 1024

    avail = max(budget - fixed, 2 * 1024 * 1024)

    def stream_bytes(ts):
        hidden = TB * ts * H * elt_bytes
        mask = TB * 8 * ts * elt_bytes          # (TB,1,TS) pads sublane 1 -> 8
        return 2 * (hidden + mask)              # double-buffered by BlockSpec

    if stream_bytes(S) <= avail:
        return TB, B_pad, S, S                  # whole sequence in one block

    per_row = 2 * TB * (H + 8) * elt_bytes
    ts_max = max(128, (avail // per_row) // 128 * 128)
    ts_max = min(ts_max, _round_up(S, 128))
    for ts in range(ts_max, 0, -128):           # prefer a divisor of S (no S pad)
        if S % ts == 0:
            return TB, B_pad, ts, S
    return TB, B_pad, ts_max, _round_up(S, ts_max)


def feedback_head_kernel(hidden_ref, mask_ref, denom_ref, w_ref, b_ref,
                         out_ref, sum_emb_ref):
    s = pl.program_id(1)

    @pl.when(s == 0)
    def _init():
        sum_emb_ref[...] = jnp.zeros_like(sum_emb_ref)

    h = hidden_ref[...]            # (TB, TS, H)  bf16 (or f32)
    m = mask_ref[...]              # (TB, 1, TS)  same dtype as h
    # Masked partial sum over this S chunk on the MXU, f32 accumulation.
    sum_emb_ref[...] += jnp.einsum('bqs,bsh->bqh', m, h,
                                   preferred_element_type=jnp.float32)

    @pl.when(s == pl.num_programs(1) - 1)
    def _finalize():
        # MeanPooling: divide by the precomputed clamped mask count.
        mean_emb = sum_emb_ref[...][:, 0, :] / denom_ref[...]      # (TB, H)
        # Dropout(p=0.2) is identity in eval/inference mode.
        logits = jnp.dot(mean_emb, w_ref[...],
                         preferred_element_type=jnp.float32) + b_ref[...]
        out_ref[...] = logits.astype(out_ref.dtype)                # (TB, C_PAD)


def feedback_head(last_hidden_state, attention_mask, fc_w, fc_b,
                  *, tile_b=DEFAULT_TILE_B):
    """Fused masked mean pooling + linear head (Pallas, tiled & pipelined)."""
    B, S, H = last_hidden_state.shape
    C = fc_w.shape[1]
    assert C <= C_PAD

    # Stream activations in whatever dtype the backbone produced (no extra
    # wrapper-side cast/copy pass over [B,S,H]).
    if last_hidden_state.dtype not in (jnp.dtype(jnp.bfloat16), jnp.dtype(jnp.float32)):
        last_hidden_state = last_hidden_state.astype(jnp.float32)
    act_dtype = last_hidden_state.dtype
    elt_bytes = jnp.dtype(act_dtype).itemsize

    budget = _vmem_budget_bytes()
    TB, B_pad, TS, S_pad = _choose_tiles(B, S, H, elt_bytes, budget, tile_b)

    hidden = last_hidden_state
    mask3 = attention_mask.astype(act_dtype)[:, None, :]                  # (B, 1, S)
    denom = jnp.maximum(jnp.sum(attention_mask.astype(jnp.float32),
                                axis=1, keepdims=True), 1e-9)             # (B, 1)

    if B_pad != B or S_pad != S:                 # padded rows have mask==0
        hidden = jnp.pad(hidden, ((0, B_pad - B), (0, S_pad - S), (0, 0)))
        mask3 = jnp.pad(mask3, ((0, B_pad - B), (0, 0), (0, S_pad - S)))
    if B_pad != B:
        denom = jnp.pad(denom, ((0, B_pad - B), (0, 0)), constant_values=1.0)

    w = jnp.pad(fc_w.astype(jnp.float32), ((0, 0), (0, C_PAD - C)))
    b = jnp.pad(fc_b.astype(jnp.float32), ((0, 0), (0, C_PAD - C)))

    grid = (B_pad // TB, S_pad // TS)

    out = pl.pallas_call(
        feedback_head_kernel,
        out_shape=jax.ShapeDtypeStruct((B_pad, C_PAD), jnp.float32),
        grid_spec=pltpu.PrefetchScalarGridSpec(
            num_scalar_prefetch=0,
            grid=grid,
            in_specs=[
                pl.BlockSpec((TB, TS, H), lambda bi, si: (bi, si, 0)),   # hidden
                pl.BlockSpec((TB, 1, TS), lambda bi, si: (bi, 0, si)),   # mask
                pl.BlockSpec((TB, 1), lambda bi, si: (bi, 0)),           # denom
                pl.BlockSpec((H, C_PAD), lambda bi, si: (0, 0)),         # fc_w
                pl.BlockSpec((1, C_PAD), lambda bi, si: (0, 0)),         # fc_b
            ],
            # constant across the S axis -> resident accumulator-style output
            out_specs=pl.BlockSpec((TB, C_PAD), lambda bi, si: (bi, 0)),
            scratch_shapes=[pltpu.VMEM((TB, 1, H), jnp.float32)],        # sum_emb
        ),
        compiler_params=pltpu.CompilerParams(
            dimension_semantics=("parallel", "arbitrary"),
            vmem_limit_bytes=budget,
        ),
    )(hidden, mask3, denom, w, b)

    return out[:B, :C]


def feedback_model_forward(ids, mask, embedding_table, fc_w, fc_b):
    """Full forward: synthetic backbone (glue) + fused Pallas pooling/head."""
    # TODO(synk): full transformer backbone (AutoModel) not translated; a
    # deterministic bf16 embedding lookup stands in and emits bf16 directly.
    last_hidden_state = jnp.take(embedding_table, ids, axis=0)   # (B, S, H)
    return feedback_head(last_hidden_state, mask, fc_w, fc_b)


def reference_forward(ids, mask, embedding_table, fc_w, fc_b):
    """Pure-JAX reference matching the PyTorch semantics (bf16 activations
    from the backbone, f32 pooling/head math, same as the Pallas path)."""
    h = jnp.take(embedding_table, ids, axis=0).astype(jnp.float32)
    m = mask.astype(jnp.float32)[:, :, None]
    sum_emb = jnp.sum(h * m, axis=1)
    sum_mask = jnp.maximum(jnp.sum(m, axis=1), 1e-9)
    mean_emb = sum_emb / sum_mask
    return mean_emb @ fc_w + fc_b[0]


if __name__ == "__main__":
    # Small shapes consistent with the forward: batch=2, seq=8, hidden=32, vocab=100.
    B, S, H, V, C = 2, 8, 32, 100, NUM_CLASSES

    key = jax.random.PRNGKey(0)
    k_emb, k_ids, k_w, k_b = jax.random.split(key, 4)

    # Backbone stand-in emits bf16 activations directly (no extra cast pass).
    embedding_table = (jax.random.normal(k_emb, (V, H), dtype=jnp.float32)
                       * 0.05).astype(jnp.bfloat16)
    ids = jax.random.randint(k_ids, (B, S), 0, V, dtype=jnp.int32)
    # attention mask: first sequence fully valid, second has 3 padded positions
    mask = jnp.array([[1] * S, [1] * (S - 3) + [0] * 3], dtype=jnp.int32)

    # nn.Linear(H, C): weight (C, H), bias (C).  Pass transposed weight (H, C).
    fc_w = (jax.random.normal(k_w, (C, H), dtype=jnp.float32) * 0.02).T  # (H, C)
    fc_b = jax.random.normal(k_b, (1, C), dtype=jnp.float32) * 0.01      # (1, C)

    out = feedback_model_forward(ids, mask, embedding_table, fc_w, fc_b)
    out = jax.block_until_ready(out)

    ref = reference_forward(ids, mask, embedding_table, fc_w, fc_b)
    assert out.shape == (B, C), out.shape
    assert jnp.allclose(out, ref, atol=1e-4, rtol=1e-4), (out, ref)

    print("KERNEL_OK")
</pallas_src>

<mosaic_0001>
module attributes {stable_mosaic.version = 11 : i64} {
  func.func @feedback_head_kernel(%arg0: i32, %arg1: i32, %arg2: memref<2x8x32xbf16, #tpu.memory_space<vmem>>, %arg3: memref<2x1x8xbf16, #tpu.memory_space<vmem>>, %arg4: memref<2x1xf32, #tpu.memory_space<vmem>>, %arg5: memref<32x128xf32, #tpu.memory_space<vmem>>, %arg6: memref<1x128xf32, #tpu.memory_space<vmem>>, %arg7: memref<2x128xf32, #tpu.memory_space<vmem>>, %arg8: memref<2x1x32xf32, #tpu.memory_space<vmem>>) attributes {dimension_semantics = [#tpu.dimension_semantics<parallel>, #tpu.dimension_semantics<arbitrary>], iteration_bounds = array<i64: 1, 1>, scalar_prefetch = 0 : i64, scratch_operands = 1 : i64, tpu.core_type = #tpu.core_type<tc>, window_params = [{transform_indices = @transform_0, window_bounds = array<i64: 2, 8, 32>}, {transform_indices = @transform_1, window_bounds = array<i64: 2, 1, 8>}, {transform_indices = @transform_2, window_bounds = array<i64: 2, 1>}, {pipeline_mode = #tpu.pipeline_mode<synchronous>, transform_indices = @transform_3, window_bounds = array<i64: 32, 128>}, {pipeline_mode = #tpu.pipeline_mode<synchronous>, transform_indices = @transform_4, window_bounds = array<i64: 1, 128>}, {transform_indices = @transform_5, window_bounds = array<i64: 2, 128>}]} {
    %c0_i32 = arith.constant 0 : i32
    %0 = arith.cmpi eq, %arg1, %c0_i32 : i32
    %1 = arith.extui %0 : i1 to i32
    %c0_i32_0 = arith.constant 0 : i32
    %2 = arith.cmpi ne, %1, %c0_i32_0 : i32
    scf.if %2 {
      %cst_14 = arith.constant 0.000000e+00 : f32
      %12 = vector.broadcast %cst_14 : f32 to vector<2x1x32xf32>
      %c0_15 = arith.constant 0 : index
      %c0_16 = arith.constant 0 : index
      %c0_17 = arith.constant 0 : index
      %13 = vector.load %arg8[%c0_15, %c0_16, %c0_17] : memref<2x1x32xf32, #tpu.memory_space<vmem>>, vector<2x1x32xf32>
      tpu.vector_store %arg8[%c0_15, %c0_16, %c0_17], %12 {strides = array<i32>} : memref<2x1x32xf32, #tpu.memory_space<vmem>>, vector<2x1x32xf32>,
    } else {
    }
    %c0 = arith.constant 0 : index
    %c0_1 = arith.constant 0 : index
    %c0_2 = arith.constant 0 : index
    %3 = vector.load %arg2[%c0, %c0_1, %c0_2] : memref<2x8x32xbf16, #tpu.memory_space<vmem>>, vector<2x8x32xbf16>
    %c0_3 = arith.constant 0 : index
    %c0_4 = arith.constant 0 : index
    %c0_5 = arith.constant 0 : index
    %4 = vector.load %arg3[%c0_3, %c0_4, %c0_5] : memref<2x1x8xbf16, #tpu.memory_space<vmem>>, vector<2x1x8xbf16>
    %c0_6 = arith.constant 0 : index
    %c0_7 = arith.constant 0 : index
    %c0_8 = arith.constant 0 : index
    %5 = vector.load %arg8[%c0_6, %c0_7, %c0_8] : memref<2x1x32xf32, #tpu.memory_space<vmem>>, vector<2x1x32xf32>
    "tpu.trace_start"() <{level = 10 : i32, message = "bqs,bsh->bqh"}> : () -> ()
    %cst = arith.constant dense<0.000000e+00> : vector<2x1x32xf32>
    %6 = tpu.matmul %4, %3, %cst {dimension_numbers = #tpu.dot_dimension_numbers<[2], [1], [1], [2], [0, 0, 0, 1, 1, 2], [0], [0]>} : vector<2x1x8xbf16>, vector<2x8x32xbf16>, vector<2x1x32xf32> -> vector<2x1x32xf32>
    "tpu.trace_stop"() : () -> ()
    %7 = arith.addf %5, %6 : vector<2x1x32xf32>
    %c0_9 = arith.constant 0 : index
    %c0_10 = arith.constant 0 : index
    %c0_11 = arith.constant 0 : index
    %8 = vector.load %arg8[%c0_9, %c0_10, %c0_11] : memref<2x1x32xf32, #tpu.memory_space<vmem>>, vector<2x1x32xf32>
    tpu.vector_store %arg8[%c0_9, %c0_10, %c0_11], %7 {strides = array<i32>} : memref<2x1x32xf32, #tpu.memory_space<vmem>>, vector<2x1x32xf32>,
    %c0_i32_12 = arith.constant 0 : i32
    %9 = arith.cmpi eq, %arg1, %c0_i32_12 : i32
    %10 = arith.extui %9 : i1 to i32
    %c0_i32_13 = arith.constant 0 : i32
    %11 = arith.cmpi ne, %10, %c0_i32_13 : i32
    scf.if %11 {
      %c0_14 = arith.constant 0 : index
      %c0_15 = arith.constant 0 : index
      %c0_16 = arith.constant 0 : index
      %12 = vector.load %arg8[%c0_14, %c0_15, %c0_16] : memref<2x1x32xf32, #tpu.memory_space<vmem>>, vector<2x1x32xf32>
      %13 = vector.shape_cast %12 : vector<2x1x32xf32> to vector<2x32xf32>
      %c0_17 = arith.constant 0 : index
      %c0_18 = arith.constant 0 : index
      %14 = vector.load %arg4[%c0_17, %c0_18] : memref<2x1xf32, #tpu.memory_space<vmem>>, vector<2x1xf32>
      %15 = vector.broadcast %14 : vector<2x1xf32> to vector<2x32xf32>
      %16 = arith.divf %13, %15 : vector<2x32xf32>
      %c0_19 = arith.constant 0 : index
      %c0_20 = arith.constant 0 : index
      %17 = vector.load %arg5[%c0_19, %c0_20] : memref<32x128xf32, #tpu.memory_space<vmem>>, vector<32x128xf32>
      %cst_21 = arith.constant dense<0.000000e+00> : vector<2x128xf32>
      %18 = tpu.matmul %16, %17, %cst_21 {dimension_numbers = #tpu.dot_dimension_numbers<[1], [0], [0], [1], [0, 0, 1, 1], [], []>} : vector<2x32xf32>, vector<32x128xf32>, vector<2x128xf32> -> vector<2x128xf32>
      %c0_22 = arith.constant 0 : index
      %c0_23 = arith.constant 0 : index
      %19 = vector.load %arg6[%c0_22, %c0_23] : memref<1x128xf32, #tpu.memory_space<vmem>>, vector<1x128xf32>
      %20 = vector.broadcast %19 : vector<1x128xf32> to vector<2x128xf32>
      %21 = arith.addf %18, %20 : vector<2x128xf32>
      %c0_24 = arith.constant 0 : index
      %c0_25 = arith.constant 0 : index
      %22 = vector.load %arg7[%c0_24, %c0_25] : memref<2x128xf32, #tpu.memory_space<vmem>>, vector<2x128xf32>
      tpu.vector_store %arg7[%c0_24, %c0_25], %21 {strides = array<i32>} : memref<2x128xf32, #tpu.memory_space<vmem>>, vector<2x128xf32>,
    } else {
    }
    return
  }
  func.func @transform_0(%arg0: i32, %arg1: i32) -> (i32, i32, i32) {
    %c0_i32 = arith.constant 0 : i32
    %c0_i32_0 = arith.constant 0 : i32
    return %arg0, %arg1, %c0_i32 : i32, i32, i32
  }
  func.func @transform_1(%arg0: i32, %arg1: i32) -> (i32, i32, i32) {
    %c0_i32 = arith.constant 0 : i32
    %c0_i32_0 = arith.constant 0 : i32
    return %arg0, %c0_i32, %arg1 : i32, i32, i32
  }
  func.func @transform_2(%arg0: i32, %arg1: i32) -> (i32, i32) {
    %c0_i32 = arith.constant 0 : i32
    %c0_i32_0 = arith.constant 0 : i32
    return %arg0, %c0_i32 : i32, i32
  }
  func.func @transform_3(%arg0: i32, %arg1: i32) -> (i32, i32) {
    %c0_i32 = arith.constant 0 : i32
    %c0_i32_0 = arith.constant 0 : i32
    %c0_i32_1 = arith.constant 0 : i32
    return %c0_i32, %c0_i32_0 : i32, i32
  }
  func.func @transform_4(%arg0: i32, %arg1: i32) -> (i32, i32) {
    %c0_i32 = arith.constant 0 : i32
    %c0_i32_0 = arith.constant 0 : i32
    %c0_i32_1 = arith.constant 0 : i32
    return %c0_i32, %c0_i32_0 : i32, i32
  }
  func.func @transform_5(%arg0: i32, %arg1: i32) -> (i32, i32) {
    %c0_i32 = arith.constant 0 : i32
    %c0_i32_0 = arith.constant 0 : i32
    return %arg0, %c0_i32 : i32, i32
  }
}

</mosaic_0001>

<llo_original>
// kernel: tpu_custom_call.1
$region0: #{tpu_custom_call.1}
  #allocation0 [shape = 'u32[]', space=smem, size = 0x4, offset = 0x4, fixed_abs, tag = 'smem constant byte address 0x4 - core index']
  #allocation1 [shape = 'u32[144,128]{1,0:T(1,128)}', space=vmem, size = 0x12000, scoped, tag = 'internal scratch']
  #allocation2 [shape = 'f32[2,1,32]{2,1,0:T(1,128)}', space=vmem, size = 0x400, scoped, tag = 'scratch operand']
  %s0 = inlined_call_operand.hbm [shape: bf16[2,8,32], index: 0, kind: input, shape index: {}]
  %s1 = inlined_call_operand.vmem [shape: bf16[2,1,8], index: 1, kind: input, shape index: {}]
  %s2 = inlined_call_operand.vmem [shape: f32[2,1], index: 2, kind: input, shape index: {}]
  %s3 = inlined_call_operand.hbm [shape: f32[32,128], index: 3, kind: input, shape index: {}]
  %s4 = inlined_call_operand.vmem [shape: f32[1,128], index: 4, kind: input, shape index: {}]
  %s5 = inlined_call_operand.hbm [shape: f32[2,128], index: 5, kind: output, shape index: {}]
  %s6 = sld [smem:[#allocation0]]
  $region46: #{tpu_custom_call.1} parent=0
    _
  %s8 = ssub.s32 1, %s6
  %s9 = scalar_select 0, %s8, %s6
  $region1: #{tpu_custom_call.1} parent=0
    #allocation3 [shape = 'u8[4096]{0}', space=vmem, size = 0x1000, scoped, tag = 'input window, operand 0, single buffered']
    #allocation4 [shape = 's32[1]{0}', space=sflag, size = 0x4, scoped, tag = 'scoped memory for tpu_custom_call.1']
    #allocation5 [shape = 's32[1]{0}', space=sflag, size = 0x4, scoped, tag = 'scoped memory for tpu_custom_call.1']
    #allocation6 [shape = 'u8[16384]{0}', space=vmem, size = 0x4000, scoped, tag = 'input window, operand 3, single buffered']
    #allocation7 [shape = 's32[1]{0}', space=sflag, size = 0x4, scoped, tag = 'scoped memory for tpu_custom_call.1']
    #allocation8 [shape = 'u8[1024]{0}', space=vmem, size = 0x400, scoped, tag = 'output window, operand 0, single buffered']
    %10 = vsyncpa [#allocation4], 0
    %11 = vsyncpa [#allocation7], 0
    %12 = vsyncpa [#allocation5], 0
    // Predicated region
    $region2: #{tpu_custom_call.1} parent=1 // pred_check
      _
    $region3: #{tpu_custom_call.1} parent=1 // pred_check_branch
      %14 = sbr.rel (0) target = $region5
    $region4: #{tpu_custom_call.1} parent=1 // pred_region
      %s16 = ssub.s32 128, 128
      %17 = vsyncadd [#allocation4], %s16
      %s18 = sshll.u32 [#allocation3], 4
      %s19 = int_to_ptr.vmem [resolvable:$true] %s18
      %24 = dma.hbm_to_vmem [thread:$0]  %s0, 128, %s19, [#allocation4], 64, 64, 4
    $region5: #{tpu_custom_call.1} parent=1 // pred_fallthru
      _
    // Predicated region
    $region6: #{tpu_custom_call.1} parent=1 // pred_check
      _
    $region7: #{tpu_custom_call.1} parent=1 // pred_check_branch
      %26 = sbr.rel (0) target = $region9
    $region8: #{tpu_custom_call.1} parent=1 // pred_region
      _
    $region9: #{tpu_custom_call.1} parent=1 // pred_fallthru
      _
    // Predicated region
    $region10: #{tpu_custom_call.1} parent=1 // pred_check
      _
    $region11: #{tpu_custom_call.1} parent=1 // pred_check_branch
      %28 = sbr.rel (0) target = $region13
    $region12: #{tpu_custom_call.1} parent=1 // pred_region
      _
    $region13: #{tpu_custom_call.1} parent=1 // pred_fallthru
      _
    // Predicated region
    $region14: #{tpu_custom_call.1} parent=1 // pred_check
      _
    $region15: #{tpu_custom_call.1} parent=1 // pred_check_branch
      %30 = sbr.rel (0) target = $region17
    $region16: #{tpu_custom_call.1} parent=1 // pred_region
      %s32 = ssub.s32 512, 512
      %33 = vsyncadd [#allocation7], %s32
      %s34 = sshll.u32 [#allocation6], 4
      %s35 = int_to_ptr.vmem [resolvable:$true] %s34
      %40 = dma.hbm_to_vmem [thread:$0]  %s3, 512, %s35, [#allocation7], 128, 128, 8
    $region17: #{tpu_custom_call.1} parent=1 // pred_fallthru
      _
    // Predicated region
    $region18: #{tpu_custom_call.1} parent=1 // pred_check
      _
    $region19: #{tpu_custom_call.1} parent=1 // pred_check_branch
      %42 = sbr.rel (0) target = $region21
    $region20: #{tpu_custom_call.1} parent=1 // pred_region
      _
    $region21: #{tpu_custom_call.1} parent=1 // pred_fallthru
      _
    // Predicated region
    $region22: #{tpu_custom_call.1} parent=1 // pred_check
      _
    $region23: #{tpu_custom_call.1} parent=1 // pred_check_branch
      %44 = sbr.rel (0) target = $region25
    $region24: #{tpu_custom_call.1} parent=1 // pred_region
      %45 = dma.done [#allocation4], 128
    $region25: #{tpu_custom_call.1} parent=1 // pred_fallthru
      _
    // Predicated region
    $region26: #{tpu_custom_call.1} parent=1 // pred_check
      _
    $region27: #{tpu_custom_call.1} parent=1 // pred_check_branch
      %47 = sbr.rel (0) target = $region29
    $region28: #{tpu_custom_call.1} parent=1 // pred_region
      %48 = dma.done [#allocation7], 512
    $region29: #{tpu_custom_call.1} parent=1 // pred_fallthru
      _
    %p50 = scmp.eq.s32.totalorder 0, 0
    // Predicated region
    $region30: #{tpu_custom_call.1} parent=1 // pred_check
      %p51 = pneg %p50
    $region31: #{tpu_custom_call.1} parent=1 // pred_check_branch
      %53 = sbr.rel (%p51) target = $region33
    $region32: #{tpu_custom_call.1} parent=1 // pred_region
      %vm54 = vcmask 253952
      %55 = vst.msk [vmem:[#allocation2] sm:$0x1] %vm54, 0.0
      %56 = vst.msk [vmem:[#allocation2 + $0x1] sm:$0x1] %vm54, 0.0
    $region33: #{tpu_custom_call.1} parent=1 // pred_fallthru
      _
    %v57 = vld [vmem:[#allocation3] sm:$0xf]
    %v58 = vld [vmem:[#allocation3 + $0x4] sm:$0xf]
    %v59 = vld [vmem:[%s1] sm:$0x1]
    %v60 = vld [vmem:[%s1 + $0x1] sm:$0x1]
    %v61 = vld [vmem:[#allocation2] sm:$0x1]
    %v62 = vld [vmem:[#allocation2 + $0x1] sm:$0x1]
    %vm63 = vcmask 64512
    %v65 = vsel %vm63, %v59, 0
    %vm67 = vcmask 1043456
    %v69 = vsel %vm67, %v57, 0
    %71 = vmatprep.subr.bf16.mxu0 0
    %72 = vmatpush1.bf16.msra.mxu0 %v69
    %73 = vmatprep.subr.bf16.mxu0 0
    %74 = vmatpush1.bf16.msra.mxu0 0
    %75 = vmatprep.subr.bf16.mxu0 0
    %76 = vmatpush1.bf16.msra.mxu0 0
    %77 = vmatprep.subr.bf16.mxu0 0
    %78 = vmatpush1.bf16.msra.mxu0 0
    %79 = vmatprep.subr.bf16.mxu0 0
    %80 = vmatpush1.bf16.msra.mxu0 0
    %81 = vmatprep.subr.bf16.mxu0 0
    %82 = vmatpush1.bf16.msra.mxu0 0
    %83 = vmatprep.subr.bf16.mxu0 0
    %84 = vmatpush1.bf16.msra.mxu0 0
    %85 = vmatprep.subr.bf16.mxu0 0
    %86 = vmatpush1.bf16.msra.mxu0 0
    %87 = vmatprep.subr.bf16.mxu0 0
    %88 = vmatpush1.bf16.msra.mxu0 0
    %89 = vmatprep.subr.bf16.mxu0 0
    %90 = vmatpush1.bf16.msra.mxu0 0
    %91 = vmatprep.subr.bf16.mxu0 0
    %92 = vmatpush1.bf16.msra.mxu0 0
    %93 = vmatprep.subr.bf16.mxu0 0
    %94 = vmatpush1.bf16.msra.mxu0 0
    %95 = vmatprep.subr.bf16.mxu0 0
    %96 = vmatpush1.bf16.msra.mxu0 0
    %97 = vmatprep.subr.bf16.mxu0 0
    %98 = vmatpush1.bf16.msra.mxu0 0
    %99 = vmatprep.subr.bf16.mxu0 0
    %100 = vmatpush1.bf16.msra.mxu0 0
    %101 = vmatprep.subr.bf16.mxu0 0
    %102 = vmatpush1.bf16.msra.mxu0 0
    %103 = vmatprep.mubr.bf16.mxu0 0
    %104 = vmatmul.mubr.bf16.gmra.mrb[0].mxu0 %v65
    %v105 = vpop.f32.mrb[0].mxu0
    %v106 = vadd.f32 0.0, %v105
    %v107 = vpop.f32.mrb[0].mxu0
    %v108 = vpop.f32.mrb[0].mxu0
    %v109 = vpop.f32.mrb[0].mxu0
    %110 = vdwg.mxu0
    %v112 = vsel %vm63, %v60, 0
    %v115 = vsel %vm67, %v58, 0
    %117 = vmatprep.subr.bf16.mxu0 0
    %118 = vmatpush1.bf16.msra.mxu0 %v115
    %119 = vmatprep.subr.bf16.mxu0 0
    %120 = vmatpush1.bf16.msra.mxu0 0
    %121 = vmatprep.subr.bf16.mxu0 0
    %122 = vmatpush1.bf16.msra.mxu0 0
    %123 = vmatprep.subr.bf16.mxu0 0
    %124 = vmatpush1.bf16.msra.mxu0 0
    %125 = vmatprep.subr.bf16.mxu0 0
    %126 = vmatpush1.bf16.msra.mxu0 0
    %127 = vmatprep.subr.bf16.mxu0 0
    %128 = vmatpush1.bf16.msra.mxu0 0
    %129 = vmatprep.subr.bf16.mxu0 0
    %130 = vmatpush1.bf16.msra.mxu0 0
    %131 = vmatprep.subr.bf16.mxu0 0
    %132 = vmatpush1.bf16.msra.mxu0 0
    %133 = vmatprep.subr.bf16.mxu0 0
    %134 = vmatpush1.bf16.msra.mxu0 0
    %135 = vmatprep.subr.bf16.mxu0 0
    %136 = vmatpush1.bf16.msra.mxu0 0
    %137 = vmatprep.subr.bf16.mxu0 0
    %138 = vmatpush1.bf16.msra.mxu0 0
    %139 = vmatprep.subr.bf16.mxu0 0
    %140 = vmatpush1.bf16.msra.mxu0 0
    %141 = vmatprep.subr.bf16.mxu0 0
    %142 = vmatpush1.bf16.msra.mxu0 0
    %143 = vmatprep.subr.bf16.mxu0 0
    %144 = vmatpush1.bf16.msra.mxu0 0
    %145 = vmatprep.subr.bf16.mxu0 0
    %146 = vmatpush1.bf16.msra.mxu0 0
    %147 = vmatprep.subr.bf16.mxu0 0
    %148 = vmatpush1.bf16.msra.mxu0 0
    %149 = vmatprep.mubr.bf16.mxu0 0
    %150 = vmatmul.mubr.bf16.gmra.mrb[0].mxu0 %v112
    %v151 = vpop.f32.mrb[0].mxu0
    %v152 = vadd.f32 0.0, %v151
    %v153 = vpop.f32.mrb[0].mxu0
    %v154 = vpop.f32.mrb[0].mxu0
    %v155 = vpop.f32.mrb[0].mxu0
    %156 = vdwg.mxu0
    %v157 = vadd.f32 %v61, %v106
    %v158 = vadd.f32 %v62, %v152
    %vm159 = vcmask 253952
    %160 = vst.msk [vmem:[#allocation2] sm:$0x1] %vm159, %v157
    %161 = vst.msk [vmem:[#allocation2 + $0x1] sm:$0x1] %vm159, %v158
    // Predicated region
    $region34: #{tpu_custom_call.1} parent=1 // pred_check
      %p162 = pneg %p50
    $region35: #{tpu_custom_call.1} parent=1 // pred_check_branch
      %164 = sbr.rel (%p162) target = $region37
    $region36: #{tpu_custom_call.1} parent=1 // pred_region
      %v165 = vld [vmem:[#allocation2] sm:$0x1]
      %v166 = vld [vmem:[#allocation2 + $0x1] sm:$0x1]
      %v167 = vld [vmem:[%s2] sm:$0x3]
      %169 = vset.pattern.permute.xlu0 0
      %170 = vperm.xlu0 %169, %v167
      %v171 = vpop.permute.xlu0 %170
      %v172 = vlaneseq
      %v173 = vshrl.u32 %v172, 7
      %v174 = vsub.s32 0, %v173
      %v175 = vrot.slane %v171, %v174
      %v176 = vlaneseq
      %v177 = vshrl.u32 %v176, 7
      %v178 = vsub.s32 1, %v177
      %v179 = vrot.slane %v171, %v178
      %v182 = vrcp.pop %v175
      %v183 = vmul.f32 %v165, %v182
      %v184 = vrcp.pop %v179
      %v185 = vmul.f32 %v166, %v184
      %v186 = vld [vmem:[#allocation6] sm:$0xff]
      %v187 = vld [vmem:[#allocation6 + $0x8] sm:$0xff]
      %v188 = vld [vmem:[#allocation6 + $0x10] sm:$0xff]
      %v189 = vld [vmem:[#allocation6 + $0x18] sm:$0xff]
      %v190 = vld [vmem:[%s4] sm:$0x1]
      %v192 = vlaneseq
      %v193 = vshrl.u32 %v192, 7
      %v194 = vsub.s32 0, %v193
      %v195 = vrot.slane %v190, %v194
      %v199 = vcombine.low %v183, %v185
      %v201 = vunpack.c.l.s4 1966171168
      %v202 = vunpack.c.0.s8 %v201
      %v203 = vlaneseq
      %v204 = vshrl.u32 %v203, 7
      %v205 = vsub.s32 %v202, %v204
      %v206 = vrot.slane %v199, %v205
      %v208 = vunpack.c.l.s4 1966171168
      %v209 = vunpack.c.0.s8 %v208
      %v210 = vlaneseq
      %v211 = vshrl.u32 %v210, 7
      %v212 = vsub.s32 %v209, %v211
      %v213 = vrot.slane %v206, %v212
      %vm214 = vcmask 261120
      %v215 = vsel %vm214, %v213, 0
      %217 = vmatprep.subr.mxu0 0.0
      %218 = vmatpush1.msra.mxu0 %v186
      %219 = vmatprep.subr.mxu0 0.0
      %220 = vmatpush1.msra.mxu0 %v187
      %221 = vmatprep.subr.mxu0 0.0
      %222 = vmatpush1.msra.mxu0 %v188
      %223 = vmatprep.subr.mxu0 0.0
      %224 = vmatpush1.msra.mxu0 %v189
      %225 = vmatprep.subr.mxu0 0.0
      %226 = vmatpush1.msra.mxu0 0.0
      %227 = vmatprep.subr.mxu0 0.0
      %228 = vmatpush1.msra.mxu0 0.0
      %229 = vmatprep.subr.mxu0 0.0
      %230 = vmatpush1.msra.mxu0 0.0
      %231 = vmatprep.subr.mxu0 0.0
      %232 = vmatpush1.msra.mxu0 0.0
      %233 = vmatprep.subr.mxu0 0.0
      %234 = vmatpush1.msra.mxu0 0.0
      %235 = vmatprep.subr.mxu0 0.0
      %236 = vmatpush1.msra.mxu0 0.0
      %237 = vmatprep.subr.mxu0 0.0
      %238 = vmatpush1.msra.mxu0 0.0
      %239 = vmatprep.subr.mxu0 0.0
      %240 = vmatpush1.msra.mxu0 0.0
      %241 = vmatprep.subr.mxu0 0.0
      %242 = vmatpush1.msra.mxu0 0.0
      %243 = vmatprep.subr.mxu0 0.0
      %244 = vmatpush1.msra.mxu0 0.0
      %245 = vmatprep.subr.mxu0 0.0
      %246 = vmatpush1.msra.mxu0 0.0
      %247 = vmatprep.subr.mxu0 0.0
      %248 = vmatpush1.msra.mxu0 0.0
      %249 = vmatprep.subr.mxu0 0.0
      %250 = vmatpush1.msra.mxu0 0.0
      %251 = vmatprep.subr.mxu0 0.0
      %252 = vmatpush1.msra.mxu0 0.0
      %253 = vmatprep.subr.mxu0 0.0
      %254 = vmatpush1.msra.mxu0 0.0
      %255 = vmatprep.subr.mxu0 0.0
      %256 = vmatpush1.msra.mxu0 0.0
      %257 = vmatprep.subr.mxu0 0.0
      %258 = vmatpush1.msra.mxu0 0.0
      %259 = vmatprep.subr.mxu0 0.0
      %260 = vmatpush1.msra.mxu0 0.0
      %261 = vmatprep.subr.mxu0 0.0
      %262 = vmatpush1.msra.mxu0 0.0
      %263 = vmatprep.subr.mxu0 0.0
      %264 = vmatpush1.msra.mxu0 0.0
      %265 = vmatprep.subr.mxu0 0.0
      %266 = vmatpush1.msra.mxu0 0.0
      %267 = vmatprep.subr.mxu0 0.0
      %268 = vmatpush1.msra.mxu0 0.0
      %269 = vmatprep.subr.mxu0 0.0
      %270 = vmatpush1.msra.mxu0 0.0
      %271 = vmatprep.subr.mxu0 0.0
      %272 = vmatpush1.msra.mxu0 0.0
      %273 = vmatprep.subr.mxu0 0.0
      %274 = vmatpush1.msra.mxu0 0.0
      %275 = vmatprep.subr.mxu0 0.0
      %276 = vmatpush1.msra.mxu0 0.0
      %277 = vmatprep.subr.mxu0 0.0
      %278 = vmatpush1.msra.mxu0 0.0
      %279 = vmatprep.subr.mxu0 0.0
      %280 = vmatpush1.msra.mxu0 0.0
      %281 = vmatprep.mubr.f32.mxu0 0.0
      %282 = vmatmul.mubr.f32.gmra.mrb[0].mxu0 %v215
      %v283 = vpop.f32.mrb[0].mxu0
      %v284 = vadd.f32 %v195, %v283
      %v285 = vpop.f32.mrb[0].mxu0
      %286 = vdwg.mxu0
      %287 = vst [vmem:[#allocation8] sm:$0x3] %v284
    $region37: #{tpu_custom_call.1} parent=1 // pred_fallthru
      _
    // Predicated region
    $region38: #{tpu_custom_call.1} parent=1 // pred_check
      _
    $region39: #{tpu_custom_call.1} parent=1 // pred_check_branch
      %289 = sbr.rel (0) target = $region41
    $region40: #{tpu_custom_call.1} parent=1 // pred_region
      %s291 = ssub.s32 32, 32
      %292 = vsyncadd [#allocation5], %s291
      %s294 = sshll.u32 [#allocation8], 4
      %s295 = int_to_ptr.vmem [resolvable:$true] %s294
      %297 = dma.vmem_to_hbm [thread:$0]  %s295, 32, %s5, [#allocation5]
    $region41: #{tpu_custom_call.1} parent=1 // pred_fallthru
      _
    // Predicated region
    $region42: #{tpu_custom_call.1} parent=1 // pred_check
      _
    $region43: #{tpu_custom_call.1} parent=1 // pred_check_branch
      %299 = sbr.rel (0) target = $region45
    $region44: #{tpu_custom_call.1} parent=1 // pred_region
      %300 = dma.done [#allocation5], 32
    $region45: #{tpu_custom_call.1} parent=1 // pred_fallthru
      _
    %301 = vsyncpa [#allocation4], 1
    %302 = vsyncpa [#allocation7], 1
    %303 = vsyncpa [#allocation5], 1

</llo_original>
